<compile_context>
chip_gen: v5e
topology: v5e:2x2
jax: 0.10.0
libtpu: 0.0.40
codegen_flags: <defaults>
</compile_context>

<pallas_src>
import functools

import jax
import jax.numpy as jnp
from jax.experimental import pallas as pl
from jax.experimental.pallas import tpu as pltpu


def _round_down(v, m):
    return (v // m) * m


def _dyatten_act_kernel(x_ref, coef_ref, o_ref, *, k):
    """One (1, c_tile, t_hw) tile: out = max_j(x * slope_j + bias_j)."""
    x = x_ref[0]                       # (c_tile, t_hw)
    coef = coef_ref[0]                 # (2k, c_tile, 1): [:k]=slopes, [k:]=biases
    res = x * coef[0] + coef[k]        # (c_tile, 1) broadcasts along lanes
    for j in range(1, k):              # k is tiny (2) -> static unroll
        res = jnp.maximum(res, x * coef[j] + coef[k + j])
    o_ref[0] = res


def _block_byte_budget():
    """Per-block byte budget for the streaming pass, sized per generation.

    v7x (64 MiB VMEM, ~3.2 TB/s HBM) wants ~4 MiB blocks so the ~0.35 us
    per-grid-step overhead stays ~10% of each step; v5e/v6e are fine at 2 MiB.
    """
    try:
        info = pltpu.get_tpu_info()
        vmem_cap = getattr(info, "vmem_capacity_bytes", None)
        if vmem_cap is not None and vmem_cap <= (96 << 20):
            return 4 << 20             # v7x-class: smaller VMEM, much faster HBM
    except Exception:
        pass
    return 2 << 20                     # v5e / v6e default


def dyatten_forward(x, params, *, k=2, hw_tile=None):
    """x: (B, C, H, W) float32 NCHW. Returns (B, C, H, W), matching DyAtten(2d).

    hw_tile: optional upper cap on the spatial tile (rounded down to a
    multiple of 128); None = auto byte-budget sizing.
    """
    B, C, H, W = x.shape
    w1, b1, w2, b2, lambdas, init_v = params

    # ---- coefficient branch (negligible FLOPs; plain XLA) -------------------
    # TODO(synk): x is read from HBM here (pool) and again by the Pallas pass;
    # fusing the pool into the upstream producer would cut traffic from 3x to
    # 2x of B*C*HW*4, but the coefficients depend on the full mean.
    theta = jnp.mean(jnp.mean(x, axis=-1), axis=-1)           # (B, C)
    h = jnp.maximum(theta @ w1 + b1, 0.0)                     # (B, C//r)
    t = 2.0 * jax.nn.sigmoid(h @ w2 + b2) - 1.0               # (B, 2kC)
    coefs = t.reshape(B, C, 2 * k) * lambdas + init_v         # (B, C, 2k)
    # Merge slopes+biases into one (B, 2k, C, 1) tensor: one BlockSpec / one
    # DMA stream, branch index j as a static leading-axis index.
    coefs = jnp.transpose(coefs, (0, 2, 1))[..., None]        # (B, 2k, C, 1)

    # ---- byte-budget-driven tiling for the elementwise streaming pass -------
    HW = H * W
    x_flat = x.reshape(B, C, HW)
    budget = _block_byte_budget()

    # Channel tile: full C unless the lane-padded coefficient block (2k rows,
    # only lane 0 of 128 used) would itself blow the budget.
    coef_row_cap = max(8, _round_down(budget // (2 * k * 128 * 4), 8))
    c_tile = C if C <= coef_row_cap else coef_row_cap

    # Spatial tile: multiple of 128 (lane-dense stores); ragged last block is
    # masked by Pallas -- safe for a pure elementwise op.  Never fall back to
    # one giant full-HW tile.
    t_hw = max(128, _round_down(budget // (c_tile * 4), 128))
    if hw_tile is not None:
        t_hw = min(t_hw, max(128, _round_down(hw_tile, 128)))
    if t_hw >= HW:
        t_hw = HW                      # single spatial tile: full extent is legal
    elif c_tile * t_hw * 4 > budget and c_tile > 8:
        # t_hw hit its 128-lane floor; shrink the channel tile instead.
        c_tile = min(c_tile, max(8, _round_down(budget // (t_hw * 4), 8)))

    n_s = pl.cdiv(HW, t_hw)
    n_c = pl.cdiv(C, c_tile)

    # v7x megacore: ensure >=2 parallel grid steps when possible so one TC is
    # not left idle for a (1,1,1) grid.
    if B * n_c * n_s < 2:
        new_t = _round_down(max(t_hw // 2, 128), 128)
        if new_t < HW:
            t_hw = new_t
            n_s = pl.cdiv(HW, t_hw)
        elif C >= 16:
            c_tile = max(8, _round_down(c_tile // 2, 8))
            n_c = pl.cdiv(C, c_tile)

    # Explicit VMEM limit: double-buffered x-in + out + (lane-padded) coef
    # blocks plus headroom; conservative for v7x's 64 MiB, above v5e's 16 MiB
    # default, trivially fine on v6e.
    c_pad = ((c_tile + 7) // 8) * 8
    hw_pad = ((t_hw + 127) // 128) * 128
    x_block_bytes = c_pad * hw_pad * 4
    coef_block_bytes = 2 * k * c_pad * 128 * 4
    working_set = 4 * x_block_bytes + 2 * coef_block_bytes
    vmem_limit = int(min(48 << 20, max(32 << 20, working_set + (8 << 20))))

    kernel = functools.partial(_dyatten_act_kernel, k=k)
    cost = pl.CostEstimate(
        flops=3 * k * B * C * HW,
        transcendentals=0,
        bytes_accessed=2 * B * C * HW * 4 + B * 2 * k * C * 4,
    )
    out_flat = pl.pallas_call(
        kernel,
        out_shape=jax.ShapeDtypeStruct((B, C, HW), x.dtype),
        grid_spec=pltpu.PrefetchScalarGridSpec(
            num_scalar_prefetch=0,
            # Keep s innermost: the coefficient index_map is s-invariant, so
            # the slope/bias block stays resident across all spatial steps.
            grid=(B, n_c, n_s),
            in_specs=[
                pl.BlockSpec((1, c_tile, t_hw), lambda b, c, s: (b, c, s)),
                pl.BlockSpec((1, 2 * k, c_tile, 1), lambda b, c, s: (b, 0, c, 0)),
            ],
            out_specs=pl.BlockSpec((1, c_tile, t_hw), lambda b, c, s: (b, c, s)),
        ),
        compiler_params=pltpu.CompilerParams(
            dimension_semantics=("parallel", "parallel", "parallel"),
            vmem_limit_bytes=vmem_limit),
        cost_estimate=cost,
    )(x_flat, coefs)
    return out_flat.reshape(B, C, H, W)


def dyatten_reference(x, params, *, k=2):
    """Pure-JAX reference mirroring the PyTorch forward exactly."""
    w1, b1, w2, b2, lambdas, init_v = params
    B, C, H, W = x.shape
    theta = jnp.mean(jnp.mean(x, axis=-1), axis=-1)           # (B, C)
    h = jnp.maximum(theta @ w1 + b1, 0.0)
    t = 2.0 * jax.nn.sigmoid(h @ w2 + b2) - 1.0               # (B, 2kC)
    coefs = t.reshape(B, C, 2 * k) * lambdas + init_v         # (B, C, 2k)
    xp = x[..., None]                                         # (B, C, H, W, 1)
    out = xp * coefs[:, :, None, None, :k] + coefs[:, :, None, None, k:]
    return jnp.max(out, axis=-1)                              # (B, C, H, W)


def make_params(key, channels, reduction=4, k=2):
    Cr = channels // reduction
    k1, k2, k3, k4 = jax.random.split(key, 4)
    w1 = jax.random.normal(k1, (channels, Cr), jnp.float32) * 0.1
    b1 = jax.random.normal(k2, (Cr,), jnp.float32) * 0.1
    w2 = jax.random.normal(k3, (Cr, 2 * k * channels), jnp.float32) * 0.1
    b2 = jax.random.normal(k4, (2 * k * channels,), jnp.float32) * 0.1
    lambdas = jnp.array([1.0] * k + [0.5] * k, jnp.float32)
    init_v = jnp.array([1.0] + [0.0] * (2 * k - 1), jnp.float32)
    return (w1, b1, w2, b2, lambdas, init_v)


if __name__ == "__main__":
    reduction, k = 4, 2
    key = jax.random.PRNGKey(0)

    # ---- main test: lane-aligned spatial extent ------------------------------
    B, C, H, W = 2, 8, 16, 16
    kx, kp, kx2, kp2 = jax.random.split(key, 4)
    x = jax.random.normal(kx, (B, C, H, W), jnp.float32)
    params = make_params(kp, C, reduction=reduction, k=k)

    out = jax.block_until_ready(dyatten_forward(x, params, k=k))
    ref = jax.block_until_ready(dyatten_reference(x, params, k=k))
    assert out.shape == (B, C, H, W)
    assert jnp.allclose(out, ref, atol=1e-5, rtol=1e-5), (
        f"max abs err {jnp.max(jnp.abs(out - ref))}")

    # ---- second test: odd H*W exercises the always-tile / ragged-block path --
    B2, C2, H2, W2 = 1, 16, 12, 12          # HW = 144, not a multiple of 128
    x2 = jax.random.normal(kx2, (B2, C2, H2, W2), jnp.float32)
    params2 = make_params(kp2, C2, reduction=reduction, k=k)
    out2 = jax.block_until_ready(dyatten_forward(x2, params2, k=k, hw_tile=128))
    ref2 = jax.block_until_ready(dyatten_reference(x2, params2, k=k))
    assert jnp.allclose(out2, ref2, atol=1e-5, rtol=1e-5), (
        f"max abs err (ragged) {jnp.max(jnp.abs(out2 - ref2))}")

    print("KERNEL_OK")
</pallas_src>

<mosaic_0001>
module attributes {stable_mosaic.version = 11 : i64} {
  func.func @_dyatten_act_kernel(%arg0: i32, %arg1: i32, %arg2: i32, %arg3: memref<1x8x256xf32, #tpu.memory_space<vmem>>, %arg4: memref<1x4x8x1xf32, #tpu.memory_space<vmem>>, %arg5: memref<1x8x256xf32, #tpu.memory_space<vmem>>) attributes {dimension_semantics = [#tpu.dimension_semantics<parallel>, #tpu.dimension_semantics<parallel>, #tpu.dimension_semantics<parallel>], iteration_bounds = array<i64: 2, 1, 1>, scalar_prefetch = 0 : i64, scratch_operands = 0 : i64, tpu.core_type = #tpu.core_type<tc>, window_params = [{transform_indices = @transform_0, window_bounds = array<i64: 1, 8, 256>}, {transform_indices = @transform_1, window_bounds = array<i64: 1, 4, 8, 1>}, {transform_indices = @transform_2, window_bounds = array<i64: 1, 8, 256>}]} {
    %c0 = arith.constant 0 : index
    %c0_0 = arith.constant 0 : index
    %c0_1 = arith.constant 0 : index
    %0 = vector.load %arg3[%c0, %c0_0, %c0_1] : memref<1x8x256xf32, #tpu.memory_space<vmem>>, vector<1x8x256xf32>
    %1 = vector.shape_cast %0 : vector<1x8x256xf32> to vector<8x256xf32>
    %c0_2 = arith.constant 0 : index
    %c0_3 = arith.constant 0 : index
    %c0_4 = arith.constant 0 : index
    %c0_5 = arith.constant 0 : index
    %2 = vector.load %arg4[%c0_2, %c0_3, %c0_4, %c0_5] : memref<1x4x8x1xf32, #tpu.memory_space<vmem>>, vector<1x4x8x1xf32>
    %3 = vector.shape_cast %2 : vector<1x4x8x1xf32> to vector<4x8x1xf32>
    %4 = vector.extract_strided_slice %3 {offsets = [0, 0, 0], sizes = [1, 8, 1], strides = [1, 1, 1]} : vector<4x8x1xf32> to vector<1x8x1xf32>
    %5 = vector.shape_cast %4 : vector<1x8x1xf32> to vector<8x1xf32>
    %6 = vector.broadcast %5 : vector<8x1xf32> to vector<8x256xf32>
    %7 = arith.mulf %1, %6 : vector<8x256xf32>
    %8 = vector.extract_strided_slice %3 {offsets = [2, 0, 0], sizes = [1, 8, 1], strides = [1, 1, 1]} : vector<4x8x1xf32> to vector<1x8x1xf32>
    %9 = vector.shape_cast %8 : vector<1x8x1xf32> to vector<8x1xf32>
    %10 = vector.broadcast %9 : vector<8x1xf32> to vector<8x256xf32>
    %11 = arith.addf %7, %10 : vector<8x256xf32>
    %12 = vector.extract_strided_slice %3 {offsets = [1, 0, 0], sizes = [1, 8, 1], strides = [1, 1, 1]} : vector<4x8x1xf32> to vector<1x8x1xf32>
    %13 = vector.shape_cast %12 : vector<1x8x1xf32> to vector<8x1xf32>
    %14 = vector.broadcast %13 : vector<8x1xf32> to vector<8x256xf32>
    %15 = arith.mulf %1, %14 : vector<8x256xf32>
    %16 = vector.extract_strided_slice %3 {offsets = [3, 0, 0], sizes = [1, 8, 1], strides = [1, 1, 1]} : vector<4x8x1xf32> to vector<1x8x1xf32>
    %17 = vector.shape_cast %16 : vector<1x8x1xf32> to vector<8x1xf32>
    %18 = vector.broadcast %17 : vector<8x1xf32> to vector<8x256xf32>
    %19 = arith.addf %15, %18 : vector<8x256xf32>
    %20 = arith.maximumf %11, %19 : vector<8x256xf32>
    %c0_6 = arith.constant 0 : index
    %c0_7 = arith.constant 0 : index
    %c0_8 = arith.constant 0 : index
    %21 = vector.load %arg5[%c0_6, %c0_7, %c0_8] : memref<1x8x256xf32, #tpu.memory_space<vmem>>, vector<1x8x256xf32>
    %22 = vector.shape_cast %21 : vector<1x8x256xf32> to vector<8x256xf32>
    %23 = vector.shape_cast %20 : vector<8x256xf32> to vector<1x8x256xf32>
    tpu.vector_store %arg5[%c0_6, %c0_7, %c0_8], %23 {strides = array<i32>} : memref<1x8x256xf32, #tpu.memory_space<vmem>>, vector<1x8x256xf32>,
    return
  }
  func.func @transform_0(%arg0: i32, %arg1: i32, %arg2: i32) -> (i32, i32, i32) {
    %c0_i32 = arith.constant 0 : i32
    return %arg0, %arg1, %arg2 : i32, i32, i32
  }
  func.func @transform_1(%arg0: i32, %arg1: i32, %arg2: i32) -> (i32, i32, i32, i32) {
    %c0_i32 = arith.constant 0 : i32
    %c0_i32_0 = arith.constant 0 : i32
    %c0_i32_1 = arith.constant 0 : i32
    return %arg0, %c0_i32, %arg1, %c0_i32_0 : i32, i32, i32, i32
  }
  func.func @transform_2(%arg0: i32, %arg1: i32, %arg2: i32) -> (i32, i32, i32) {
    %c0_i32 = arith.constant 0 : i32
    return %arg0, %arg1, %arg2 : i32, i32, i32
  }
}

</mosaic_0001>

<llo_original>
// kernel: tpu_custom_call.1
$region0: #{tpu_custom_call.1}
  #allocation0 [shape = 'u32[]', space=smem, size = 0x4, offset = 0x4, fixed_abs, tag = 'smem constant byte address 0x4 - core index']
  #allocation1 [shape = 'u32[72,128]{1,0:T(1,128)}', space=vmem, size = 0x9000, scoped, tag = 'internal scratch']
  %s0 = inlined_call_operand.vmem [shape: f32[2,8,256], index: 0, kind: input, shape index: {}]
  %s1 = inlined_call_operand.vmem [shape: f32[2,4,8,1], index: 1, kind: input, shape index: {}]
  %s2 = inlined_call_operand.hbm [shape: f32[2,8,256], index: 2, kind: output, shape index: {}]
  %s3 = sld [smem:[#allocation0]]
  $region41: #{tpu_custom_call.1} parent=0
    _
  %s5 = ssub.s32 1, %s3
  %s6 = scalar_select 0, %s5, %s3
  $region1: #{tpu_custom_call.1} parent=0
    #allocation2 [shape = 'u8[16384]{0}', space=vmem, size = 0x4000, scoped, tag = 'output window, operand 0']
    #allocation3 [shape = 's32[2]{0}', space=sflag, size = 0x8, scoped, tag = 'scoped memory for tpu_custom_call.1']
    %7 = vsyncpa [#allocation3], 0
    %s8 = scalar_lea.sflag [#allocation3], 1
    %9 = vsyncpa %s8, 0
    loop: start=0, step=1, limit=4
    $region2: #{tpu_custom_call.1} parent=1 // loop_pre_header
      _
    $region3: #{tpu_custom_call.1} parent=1 // loop_header
      %s11 = sphi 0, %s15
      %p12 = scmp.ge.s32.totalorder %s11, 4
      %s18 = sphi 0, %s37
      %s19 = sphi 0, %s33
      %s20 = sphi 0, %s29
      %s21 = sphi 0, %s18
      %s22 = sphi 0, %s19
      %s23 = sphi 0, %s20
      %s24 = sphi 0, %s21
      %s25 = sphi 0, %s22
      %s26 = sphi 0, %s23
      %s44 = sphi 0, %s46
      %s47 = sphi 0, %s44
      %s48 = sphi 0, %s47
      %s64 = sphi 0, %s48
      %s72 = sphi 0, %s74
      %s75 = sphi 0, %s72
      %s76 = sphi 0, %s75
      %s92 = sphi 0, %s76
      %s102 = sphi 0, %s104
      %s105 = sphi 0, %s102
      %s106 = sphi 0, %s105
      %s122 = sphi 0, %s106
    $region4: #{tpu_custom_call.1} parent=1 // loop_header_branch
      %14 = sbr.rel (%p12) target = $region8
    $region5: #{tpu_custom_call.1} parent=1 // loop_body
      %s16 = ssub.s32 %s11, 1
      %s17 = ssub.s32 %s11, 2
      %s27 = sadd.s32 1, %s20
      %p28 = scmp.ge.s32.totalorder %s27, 1
      %s29 = scalar_select %p28, 0, %s27
      %s30 = sadd.s32 1, %s19
      %s31 = scalar_select %p28, %s30, %s19
      %p32 = scmp.ge.s32.totalorder %s31, 1
      %s33 = scalar_select %p32, 0, %s31
      %s34 = sadd.s32 1, %s18
      %s35 = scalar_select %p32, %s34, %s18
      %p36 = scmp.ge.s32.totalorder %s35, 2
      %s37 = scalar_select %p36, 0, %s35
      %s38 = ssub.s32 %s18, %s37
      %s39 = ssub.s32 %s19, %s33
      %s40 = sor.u32 %s38, %s39
      %s41 = ssub.s32 %s20, %s29
      %s42 = sor.u32 %s40, %s41
      %p43 = scmp.eq.s32.totalorder %s42, 0
      %s45 = sadd.s32 %s44, 1
      %s46 = scalar_select %p43, %s44, %s45
      %p49 = pneg %p43
      %p50 = scmp.eq.s32.totalorder %s11, 1
      %p51 = por %p49, %p50
      %p52 = scmp.ne.s32.totalorder %s44, %s47
      %p53 = scmp.eq.s32.totalorder %s11, 0
      %p54 = por %p52, %p53
      %p55 = scmp.ne.s32.totalorder %s44, %s47
      %p56 = scmp.eq.s32.totalorder %s16, 1
      %p57 = por %p55, %p56
      %p58 = scmp.ne.s32.totalorder %s47, %s48
      %p59 = scmp.eq.s32.totalorder %s16, 0
      %p60 = por %p58, %p59
      %p61 = scmp.ne.s32.totalorder %s47, %s48
      %p62 = scmp.eq.s32.totalorder %s17, 1
      %p63 = por %p61, %p62
      %p65 = scmp.ne.s32.totalorder %s48, %s64
      %p66 = scmp.eq.s32.totalorder %s17, 0
      %p67 = por %p65, %p66
      %s68 = ssub.s32 %s18, %s37
      %s69 = ssub.s32 %s19, %s33
      %s70 = sor.u32 %s68, %s69
      %p71 = scmp.eq.s32.totalorder %s70, 0
      %s73 = sadd.s32 %s72, 1
      %s74 = scalar_select %p71, %s72, %s73
      %p77 = pneg %p71
      %p78 = scmp.eq.s32.totalorder %s11, 1
      %p79 = por %p77, %p78
      %p80 = scmp.ne.s32.totalorder %s72, %s75
      %p81 = scmp.eq.s32.totalorder %s11, 0
      %p82 = por %p80, %p81
      %p83 = scmp.ne.s32.totalorder %s72, %s75
      %p84 = scmp.eq.s32.totalorder %s16, 1
      %p85 = por %p83, %p84
      %p86 = scmp.ne.s32.totalorder %s75, %s76
      %p87 = scmp.eq.s32.totalorder %s16, 0
      %p88 = por %p86, %p87
      %p89 = scmp.ne.s32.totalorder %s75, %s76
      %p90 = scmp.eq.s32.totalorder %s17, 1
      %p91 = por %p89, %p90
      %p93 = scmp.ne.s32.totalorder %s76, %s92
      %p94 = scmp.eq.s32.totalorder %s17, 0
      %p95 = por %p93, %p94
      %s96 = ssub.s32 %s18, %s37
      %s97 = ssub.s32 %s19, %s33
      %s98 = sor.u32 %s96, %s97
      %s99 = ssub.s32 %s20, %s29
      %s100 = sor.u32 %s98, %s99
      %p101 = scmp.eq.s32.totalorder %s100, 0
      %s103 = sadd.s32 %s102, 1
      %s104 = scalar_select %p101, %s102, %s103
      %p107 = pneg %p101
      %p108 = scmp.eq.s32.totalorder %s11, 1
      %p109 = por %p107, %p108
      %p110 = scmp.ne.s32.totalorder %s102, %s105
      %p111 = scmp.eq.s32.totalorder %s11, 0
      %p112 = por %p110, %p111
      %p113 = scmp.ne.s32.totalorder %s102, %s105
      %p114 = scmp.eq.s32.totalorder %s16, 1
      %p115 = por %p113, %p114
      %p116 = scmp.ne.s32.totalorder %s105, %s106
      %p117 = scmp.eq.s32.totalorder %s16, 0
      %p118 = por %p116, %p117
      %p119 = scmp.ne.s32.totalorder %s105, %s106
      %p120 = scmp.eq.s32.totalorder %s17, 1
      %p121 = por %p119, %p120
      %p123 = scmp.ne.s32.totalorder %s106, %s122
      %p124 = scmp.eq.s32.totalorder %s17, 0
      %p125 = por %p123, %p124
      %p126 = scmp.le.s32.totalorder 1, %s11
      %p127 = scmp.lt.s32.totalorder %s11, 3
      %p128 = pnand %p126, %p127
      %p129 = pneg %p128
      // Predicated region
      $region9: #{tpu_custom_call.1} parent=5 // pred_check
        _
      $region10: #{tpu_custom_call.1} parent=5 // pred_check_branch
        %131 = sbr.rel (%p128) target = $region12
      $region11: #{tpu_custom_call.1} parent=5 // pred_region
        %s132 = ssub.s32 %s11, 1
      $region12: #{tpu_custom_call.1} parent=5 // pred_fallthru
        _
      %p133 = scmp.lt.s32.totalorder %s11, 2
      // Predicated region
      $region13: #{tpu_custom_call.1} parent=5 // pred_check
        %p134 = pneg %p133
      $region14: #{tpu_custom_call.1} parent=5 // pred_check_branch
        %136 = sbr.rel (%p134) target = $region16
      $region15: #{tpu_custom_call.1} parent=5 // pred_region
        // Predicated region
        $region17: #{tpu_custom_call.1} parent=15 // pred_check
          %p137 = pneg %p54
        $region18: #{tpu_custom_call.1} parent=15 // pred_check_branch
          %139 = sbr.rel (%p137) target = $region20
        $region19: #{tpu_custom_call.1} parent=15 // pred_region
          %s140 = smul.u32 2, %s20
          %p141 = scmp.lt.s32.totalorder %s18, 1
          %s142 = scalar_select %p141, %s18, 1
          %p143 = scmp.lt.s32.totalorder %s19, 0
          %s144 = scalar_select %p143, %s19, 0
          %p145 = scmp.lt.s32.totalorder %s140, 1
          %s146 = scalar_select %p145, %s140, 1
          %s147 = smul.addr %s144, 2
          %s148 = sadd.s32 %s146, %s147
          %s149 = smul.addr %s142, 2
          %s150 = sadd.s32 %s148, %s149
          %s151 = smul.addr %s150, 8
          %s152 = scalar_lea.vmem %s0, %s151
          %s153 = smul.u32 2, %s20
        $region20: #{tpu_custom_call.1} parent=15 // pred_fallthru
          _
        // Predicated region
        $region21: #{tpu_custom_call.1} parent=15 // pred_check
          %p154 = pneg %p82
        $region22: #{tpu_custom_call.1} parent=15 // pred_check_branch
          %156 = sbr.rel (%p154) target = $region24
        $region23: #{tpu_custom_call.1} parent=15 // pred_region
          %p157 = scmp.lt.s32.totalorder %s18, 1
          %s158 = scalar_select %p157, %s18, 1
          %p159 = scmp.lt.s32.totalorder %s19, 0
          %s160 = scalar_select %p159, %s19, 0
          %s161 = smul.addr %s158, 4
          %s162 = sadd.s32 %s160, %s161
          %s163 = smul.addr %s162, 8
          %s164 = scalar_lea.vmem %s1, %s163
        $region24: #{tpu_custom_call.1} parent=15 // pred_fallthru
          _
      $region16: #{tpu_custom_call.1} parent=5 // pred_fallthru
        _
      %p165 = scmp.le.s32.totalorder 1, %s11
      %p166 = scmp.lt.s32.totalorder %s11, 3
      %p167 = pnand %p165, %p166
      %p168 = pneg %p167
      // Predicated region
      $region25: #{tpu_custom_call.1} parent=5 // pred_check
        _
      $region26: #{tpu_custom_call.1} parent=5 // pred_check_branch
        %170 = sbr.rel (%p167) target = $region28
      $region27: #{tpu_custom_call.1} parent=5 // pred_region
        %s171 = ssub.s32 %s11, 1
        %s172 = smul.u32 2, %s23
        %p173 = scmp.lt.s32.totalorder %s21, 1
        %s174 = scalar_select %p173, %s21, 1
        %p175 = scmp.lt.s32.totalorder %s22, 0
        %s176 = scalar_select %p175, %s22, 0
        %p177 = scmp.lt.s32.totalorder %s172, 1
        %s178 = scalar_select %p177, %s172, 1
        %s179 = smul.addr %s176, 2
        %s180 = sadd.s32 %s178, %s179
        %s181 = smul.addr %s174, 2
        %s182 = sadd.s32 %s180, %s181
        %s183 = smul.addr %s182, 8
        %s184 = scalar_lea.vmem %s0, %s183
        %p185 = pneg %p60
        %p186 = pneg %p57
        %p187 = scmp.lt.s32.totalorder %s21, 1
        %s188 = scalar_select %p187, %s21, 1
        %p189 = scmp.lt.s32.totalorder %s22, 0
        %s190 = scalar_select %p189, %s22, 0
        %s191 = smul.addr %s188, 4
        %s192 = sadd.s32 %s190, %s191
        %s193 = smul.addr %s192, 8
        %s194 = scalar_lea.vmem %s1, %s193
        %p195 = pneg %p88
        %p196 = pneg %p85
        %p197 = pneg %p118
        %p198 = pneg %p115
        %s199 = sand.u32 %s105, 1
        %s200 = scalar_lea.sflag [#allocation3], %s199
        %s201 = sand.u32 %s105, 1
        %s202 = smul.addr %s201, 16
        %s203 = scalar_lea.vmem [#allocation2], %s202
        %s204 = smul.u32 2, %s23
        %p205 = scmp.lt.s32.totalorder %s21, 1
        %s206 = scalar_select %p205, %s21, 1
        %p207 = scmp.lt.s32.totalorder %s22, 0
        %s208 = scalar_select %p207, %s22, 0
        %p209 = scmp.lt.s32.totalorder %s204, 1
        %s210 = scalar_select %p209, %s204, 1
        %s211 = smul.addr %s208, 2
        %s212 = sadd.s32 %s210, %s211
        %s213 = smul.addr %s206, 2
        %s214 = sadd.s32 %s212, %s213
        %s215 = smul.addr %s214, 8
        %s216 = scalar_lea.vmem %s0, %s215
        %s217 = smul.u32 2, %s23
        %p218 = scmp.lt.s32.totalorder %s21, 1
        %s219 = scalar_select %p218, %s21, 1
        %p220 = scmp.lt.s32.totalorder %s22, 0
        %s221 = scalar_select %p220, %s22, 0
        %s222 = smul.addr %s219, 4
        %s223 = sadd.s32 %s221, %s222
        %s224 = smul.addr %s223, 8
        %s225 = scalar_lea.vmem %s1, %s224
        %s226 = smul.u32 2, %s23
        %v227 = vld [vmem:[%s216] sm:$0xff]
        %v228 = vld [vmem:[%s216 + $0x8] sm:$0xff]
        %v229 = vld [vmem:[%s225] sm:$0xff]
        %v230 = vld [vmem:[%s225 + $0x8] sm:$0xff]
        %v231 = vld [vmem:[%s225 + $0x10] sm:$0xff]
        %v232 = vld [vmem:[%s225 + $0x18] sm:$0xff]
        %234 = vset.pattern.permute.xlu0 0
        %235 = vperm.xlu0 %234, %v229
        %v236 = vpop.permute.xlu0 %235
        %v238 = vmul.f32 %v227, %v236
        %v239 = vmul.f32 %v228, %v236
        %241 = vset.pattern.permute.xlu0 0
        %242 = vperm.xlu0 %241, %v231
        %v243 = vpop.permute.xlu0 %242
        %v245 = vadd.f32 %v238, %v243
        %v246 = vadd.f32 %v239, %v243
        %248 = vset.pattern.permute.xlu0 0
        %249 = vperm.xlu0 %248, %v230
        %v250 = vpop.permute.xlu0 %249
        %v252 = vmul.f32 %v227, %v250
        %v253 = vmul.f32 %v228, %v250
        %255 = vset.pattern.permute.xlu0 0
        %256 = vperm.xlu0 %255, %v232
        %v257 = vpop.permute.xlu0 %256
        %v259 = vadd.f32 %v252, %v257
        %v260 = vadd.f32 %v253, %v257
        %v261 = vmax.f32 %v245, %v259
        %v262 = vmax.f32 %v246, %v260
        %263 = vst [vmem:[%s203] sm:$0xff] %v261
        %264 = vst [vmem:[%s203 + $0x8] sm:$0xff] %v262
        %s265 = sand.u32 %s105, 1
        %s266 = scalar_lea.sflag [#allocation3], %s265
        %s267 = sand.u32 %s105, 1
        %s268 = smul.addr %s267, 16
        %s269 = scalar_lea.vmem [#allocation2], %s268
        // Predicated region
        $region29: #{tpu_custom_call.1} parent=27 // pred_check
          %p270 = pneg %p115
        $region30: #{tpu_custom_call.1} parent=27 // pred_check_branch
          %272 = sbr.rel (%p270) target = $region32
        $region31: #{tpu_custom_call.1} parent=27 // pred_region
          %s273 = smul.u32 2, %s23
          %275 = vsyncadd %s266, 0
          %s276 = smul.addr %s22, 2
          %s277 = sadd.s32 %s273, %s276
          %s278 = smul.addr %s21, 2
          %s279 = sadd.s32 %s277, %s278
          %s280 = smul.addr %s279, 8
          %s281 = scalar_lea.hbm %s2, %s280
          %s283 = sshll.u32 %s269, 4
          %s284 = int_to_ptr.vmem [resolvable:$true] %s283
          %s285 = sshll.u32 %s281, 4
          %s286 = int_to_ptr.hbm [resolvable:$true] %s285
          %288 = dma.vmem_to_hbm [thread:$0]  %s284, 256, %s286, %s266
        $region32: #{tpu_custom_call.1} parent=27 // pred_fallthru
          _
      $region28: #{tpu_custom_call.1} parent=5 // pred_fallthru
        _
      %p289 = scmp.le.s32.totalorder 2, %s11
      // Predicated region
      $region33: #{tpu_custom_call.1} parent=5 // pred_check
        %p290 = pneg %p289
      $region34: #{tpu_custom_call.1} parent=5 // pred_check_branch
        %292 = sbr.rel (%p290) target = $region36
      $region35: #{tpu_custom_call.1} parent=5 // pred_region
        %s293 = ssub.s32 %s11, 2
        // Predicated region
        $region37: #{tpu_custom_call.1} parent=35 // pred_check
          %p294 = pneg %p121
        $region38: #{tpu_custom_call.1} parent=35 // pred_check_branch
          %296 = sbr.rel (%p294) target = $region40
        $region39: #{tpu_custom_call.1} parent=35 // pred_region
          %s297 = sand.u32 %s106, 1
          %s298 = scalar_lea.sflag [#allocation3], %s297
          %s299 = sand.u32 %s106, 1
          %s300 = smul.addr %s299, 16
          %s301 = scalar_lea.vmem [#allocation2], %s300
          %303 = dma.done %s298, 256
        $region40: #{tpu_custom_call.1} parent=35 // pred_fallthru
          _
      $region36: #{tpu_custom_call.1} parent=5 // pred_fallthru
        _
    $region6: #{tpu_custom_call.1} parent=1 // loop_footer
      %s15 = sadd.s32 1, %s11
    $region7: #{tpu_custom_call.1} parent=1 // loop_footer_branch
      %10 = sbr.rel target = $region3
    $region8: #{tpu_custom_call.1} parent=1 // loop_exit
      _
    %304 = vsyncpa [#allocation3], 1
    %s305 = scalar_lea.sflag [#allocation3], 1
    %306 = vsyncpa %s305, 1

</llo_original>
